<compile_context>
chip_gen: v6e
topology: v6e:2x2x1
jax: 0.10.0
libtpu: 0.0.40
codegen_flags: <defaults>
</compile_context>

<pallas_src>
import functools

import jax
import jax.numpy as jnp
import numpy as np
from jax.experimental import pallas as pl
from jax.experimental.pallas import tpu as pltpu


# ----------------------------------------------------------------------------
# small helpers
# ----------------------------------------------------------------------------

def _round_up(x, m):
    return ((x + m - 1) // m) * m


def _pad2d(x, rows, cols):
    r, c = x.shape
    return jnp.pad(x, ((0, rows - r), (0, cols - c)))


def _full_block(shape):
    """BlockSpec covering the whole array (grid=(1,))."""
    n = len(shape)
    return pl.BlockSpec(shape, lambda i, n=n: (0,) * n)


# ----------------------------------------------------------------------------
# Pallas kernels
# ----------------------------------------------------------------------------

def _gather_token_rows(ids_ref, emb_hbm, x_vmem, sems, *, row, seq_len, vocab):
    """DMA-gather the `seq_len` token-embedding rows of batch row `row`.

    ids_ref: (B, L) int32 in SMEM (scalar prefetch); emb_hbm: (V, D_pad) f32
    in HBM (pl.ANY); x_vmem: (L, D_pad) f32 VMEM scratch.  All L row-DMAs are
    started first (overlapped), then waited.  At large L use pl.loop / deeper
    manual double-buffering instead of the static Python loop.
    """
    copies = []
    for l in range(seq_len):
        # clamp: nn.Embedding would raise on OOB ids; an unchecked DMA must not.
        tok = jnp.clip(ids_ref[row, l], 0, vocab - 1)
        cp = pltpu.make_async_copy(emb_hbm.at[pl.ds(tok, 1), :],
                                   x_vmem.at[pl.ds(l, 1), :],
                                   sems.at[l])
        cp.start()
        copies.append(cp)
    for cp in copies:
        cp.wait()


def _encode_kernel(ids_ref, emb_hbm, w_ref, bias_ref, o_ref, x_vmem, sems, *,
                   seq_len, vocab):
    """Per-batch-row encoder: gather L rows -> Linear(bf16 MXU) -> tanh."""
    row = pl.program_id(0)
    _gather_token_rows(ids_ref, emb_hbm, x_vmem, sems,
                       row=row, seq_len=seq_len, vocab=vocab)
    x = x_vmem[...].astype(jnp.bfloat16)                          # (L, Dp)
    h = jnp.tanh(jnp.dot(x, w_ref[...],
                         preferred_element_type=jnp.float32) + bias_ref[...])
    o_ref[...] = h.reshape(o_ref.shape)                           # (1, L, Dp)


def _encode_pool_kernel(ids_ref, mask_ref, emb_hbm, w_ref, bias_ref, o_ref,
                        x_vmem, sems, *, seq_len, vocab):
    """Fused encoder + masked mean pooling; emits only the pooled (1, Dp) row."""
    row = pl.program_id(0)
    _gather_token_rows(ids_ref, emb_hbm, x_vmem, sems,
                       row=row, seq_len=seq_len, vocab=vocab)
    x = x_vmem[...].astype(jnp.bfloat16)                          # (L, Dp)
    h = jnp.tanh(jnp.dot(x, w_ref[...],
                         preferred_element_type=jnp.float32) + bias_ref[...])
    mrow = mask_ref[0]                                            # (1, L) f32
    num = jnp.dot(mrow, h, preferred_element_type=jnp.float32)    # (1, Dp)
    # eps guard: an all-zero attention row would be NaN in the PyTorch
    # reference; here it yields 0 instead (documented semantic difference).
    den = jnp.maximum(jnp.sum(mrow, axis=1, keepdims=True), 1e-9)
    o_ref[...] = (num * pl.reciprocal(den, approx=True)).reshape(o_ref.shape)


def _cluster_prob_kernel(e_ref, ct_ref, csq_ref, o_ref, *, alpha, k_valid):
    """Student-t soft assignment with pre-transposed / pre-reduced centers.

    ||e - c||^2 = ||e||^2 + ||c||^2 - 2 * e @ c^T, kept in f32 (cancellation).
    Padded cluster columns (k >= k_valid) are masked out of the row sum.
    """
    e = e_ref[...]                                                # (N, Dp) f32
    e_sq = jnp.sum(e * e, axis=1, keepdims=True)                  # (N, 1)
    cross = jnp.dot(e, ct_ref[...], preferred_element_type=jnp.float32)
    d2 = jnp.maximum(e_sq + csq_ref[...] - 2.0 * cross, 0.0)      # (N, Kp)
    num = pl.reciprocal(1.0 + d2 * (1.0 / alpha), approx=True)
    power = (alpha + 1.0) / 2.0
    if power != 1.0:                       # skip the EUP log+exp when alpha==1
        num = num ** power
    col = jax.lax.broadcasted_iota(jnp.int32, num.shape, 1)
    num = jnp.where(col < k_valid, num, 0.0)                      # mask K pad
    den = jnp.sum(num, axis=1, keepdims=True)
    o_ref[...] = num * pl.reciprocal(den, approx=True)


def _contrast_head_kernel(x_ref, w1_ref, b1_ref, w2_ref, b2_ref, o_ref):
    """Linear(D,D) -> ReLU -> Linear(D,128) -> L2 normalize (rsqrt on EUP)."""
    x = x_ref[...].astype(jnp.bfloat16)                           # (N, Dp)
    h = jnp.dot(x, w1_ref[...], preferred_element_type=jnp.float32) + b1_ref[...]
    h = jnp.maximum(h, 0.0)
    f = jnp.dot(h.astype(jnp.bfloat16), w2_ref[...],
                preferred_element_type=jnp.float32) + b2_ref[...]
    ssq = jnp.sum(f * f, axis=1, keepdims=True)
    # matches F.normalize(dim=1, eps=1e-12): 1e-24 == eps**2
    o_ref[...] = f * jax.lax.rsqrt(jnp.maximum(ssq, 1e-24))


# ----------------------------------------------------------------------------
# Python wrappers around pallas_call
# ----------------------------------------------------------------------------

def bert_encode(input_ids, tok_emb, enc_w, enc_b, emb_size):
    """Encoder only -> (B, L, emb_size) hidden state (forward())."""
    B, L = input_ids.shape
    V, Dp = tok_emb.shape
    ids = input_ids.astype(jnp.int32)
    out = pl.pallas_call(
        functools.partial(_encode_kernel, seq_len=L, vocab=V),
        out_shape=jax.ShapeDtypeStruct((B, L, Dp), jnp.float32),
        grid_spec=pltpu.PrefetchScalarGridSpec(
            num_scalar_prefetch=1,                      # ids -> SMEM
            grid=(B,),
            in_specs=[
                pl.BlockSpec(memory_space=pl.ANY),                  # tok table in HBM
                pl.BlockSpec((Dp, Dp), lambda b, _ids: (0, 0)),     # enc_w resident
                pl.BlockSpec((1, Dp), lambda b, _ids: (0, 0)),      # enc_b resident
            ],
            out_specs=pl.BlockSpec((1, L, Dp), lambda b, _ids: (b, 0, 0)),
            scratch_shapes=[pltpu.VMEM((L, Dp), jnp.float32),
                            pltpu.SemaphoreType.DMA((L,))],
        ),
        compiler_params=pltpu.CompilerParams(
            dimension_semantics=("parallel",)),
    )(ids, tok_emb, enc_w, enc_b)
    return out[:, :, :emb_size]


def bert_encode_mean_pool(input_ids, attention_mask, tok_emb, enc_w, enc_b,
                          emb_size):
    """Fused encoder + masked mean pooling -> (B, emb_size). One launch."""
    B, L = input_ids.shape
    V, Dp = tok_emb.shape
    ids = input_ids.astype(jnp.int32)
    mask3 = attention_mask.astype(jnp.float32).reshape(B, 1, L)
    out = pl.pallas_call(
        functools.partial(_encode_pool_kernel, seq_len=L, vocab=V),
        out_shape=jax.ShapeDtypeStruct((B, 1, Dp), jnp.float32),
        grid_spec=pltpu.PrefetchScalarGridSpec(
            num_scalar_prefetch=1,
            grid=(B,),
            in_specs=[
                pl.BlockSpec((1, 1, L), lambda b, _ids: (b, 0, 0)),  # mask row
                pl.BlockSpec(memory_space=pl.ANY),                   # tok table HBM
                pl.BlockSpec((Dp, Dp), lambda b, _ids: (0, 0)),
                pl.BlockSpec((1, Dp), lambda b, _ids: (0, 0)),
            ],
            out_specs=pl.BlockSpec((1, 1, Dp), lambda b, _ids: (b, 0, 0)),
            scratch_shapes=[pltpu.VMEM((L, Dp), jnp.float32),
                            pltpu.SemaphoreType.DMA((L,))],
        ),
        compiler_params=pltpu.CompilerParams(
            dimension_semantics=("parallel",)),
    )(ids, mask3, tok_emb, enc_w, enc_b)
    return out.reshape(B, Dp)[:, :emb_size]


def cluster_prob(embeddings, c_t_pad, c_sq_pad, alpha, n_clusters):
    """Student-t cluster probabilities -> (N, n_clusters).

    N is tiny here, so one full-array VMEM block; at production batch, tile N
    on a 'parallel' grid axis (blocks of >=8 rows).
    """
    N, D = embeddings.shape
    Dp, Kp = c_t_pad.shape
    e = jnp.pad(embeddings.astype(jnp.float32), ((0, 0), (0, Dp - D)))
    out = pl.pallas_call(
        functools.partial(_cluster_prob_kernel, alpha=float(alpha),
                          k_valid=int(n_clusters)),
        out_shape=jax.ShapeDtypeStruct((N, Kp), jnp.float32),
        grid=(1,),
        in_specs=[_full_block((N, Dp)), _full_block((Dp, Kp)),
                  _full_block((1, Kp))],
        out_specs=_full_block((N, Kp)),
    )(e, c_t_pad, c_sq_pad)
    return out[:, :n_clusters]


def contrast_head(x, w1, b1, w2, b2):
    N, D = x.shape
    Dp = w1.shape[0]
    F_out = w2.shape[1]
    xp = jnp.pad(x.astype(jnp.float32), ((0, 0), (0, Dp - D)))
    return pl.pallas_call(
        _contrast_head_kernel,
        out_shape=jax.ShapeDtypeStruct((N, F_out), jnp.float32),
        grid=(1,),
        in_specs=[_full_block((N, Dp)), _full_block((Dp, Dp)),
                  _full_block((1, Dp)), _full_block((Dp, F_out)),
                  _full_block((1, F_out))],
        out_specs=_full_block((N, F_out)),
    )(xp, w1, b1, w2, b2)


# ----------------------------------------------------------------------------
# SCCLCyclic (Pallas version)
# ----------------------------------------------------------------------------

class SCCLCyclicPallas:
    def __init__(self, key, vocab_size, emb_size, cluster_centers, alpha=1.0):
        self.alpha = float(alpha)
        self.emb_size = int(emb_size)
        self.vocab_size = int(vocab_size)
        D = self.emb_size
        Dp = _round_up(D, 128)          # lane-dense padding of the feature dim
        self.d_pad = Dp

        centers = jnp.asarray(cluster_centers, jnp.float32)
        K = centers.shape[0]
        Kp = _round_up(K, 128)
        self.n_clusters = K

        k = jax.random.split(key, 6)
        # Synthetic "bert": token embedding + one Linear+tanh encoder layer.
        # TODO(synk): the real module wraps an external pretrained bert_model;
        # no checkpoint is available in-script, so this deterministic stand-in
        # defines the encoder semantics.
        tok = jax.random.normal(k[0], (vocab_size, D), jnp.float32) * 0.1
        # keep values bf16-representable so the in-kernel bf16 cast of gathered
        # rows is lossless (table kept f32 in HBM for simple single-row DMAs;
        # at production vocab store it bf16 to halve the gather bytes).
        tok = tok.astype(jnp.bfloat16).astype(jnp.float32)
        self.tok_emb = _pad2d(tok, vocab_size, Dp)                 # (V, Dp) f32, HBM

        self.enc_w = _pad2d(jax.random.normal(k[1], (D, D), jnp.float32) * 0.1,
                            Dp, Dp).astype(jnp.bfloat16)           # bf16 MXU operand
        self.enc_b = jnp.zeros((1, Dp), jnp.float32)

        # contrast_head: Linear(D, D) -> ReLU -> Linear(D, 128)
        self.ch_w1 = _pad2d(jax.random.normal(k[2], (D, D), jnp.float32) * 0.1,
                            Dp, Dp).astype(jnp.bfloat16)
        self.ch_b1 = _pad2d(jax.random.normal(k[3], (1, D), jnp.float32) * 0.01,
                            1, Dp)
        self.ch_w2 = _pad2d(jax.random.normal(k[4], (D, 128), jnp.float32) * 0.1,
                            Dp, 128).astype(jnp.bfloat16)
        self.ch_b2 = jax.random.normal(k[5], (1, 128), jnp.float32) * 0.01

        # cluster centers ("Parameter"); pre-transposed / pre-reduced forms are
        # what the kernel consumes (recompute these per step when training).
        self.cluster_centers = centers                              # (K, D) f32
        self.c_t_pad = _pad2d(centers.T, Dp, Kp)                    # (Dp, Kp) f32
        self.c_sq_pad = _pad2d(
            jnp.sum(centers * centers, axis=1, keepdims=True).T, 1, Kp)

    # ---- bert(input_ids) -> (last_hidden_state,) ----
    def _bert(self, input_ids):
        return (bert_encode(input_ids, self.tok_emb, self.enc_w, self.enc_b,
                            self.emb_size),)

    def forward(self, data_batch):
        return self._bert(data_batch)

    def get_mean_embeddings(self, input_ids, attention_mask):
        # fused gather + encoder + masked mean pooling: one pallas_call, the
        # hidden state never leaves VMEM.
        return bert_encode_mean_pool(input_ids, attention_mask, self.tok_emb,
                                     self.enc_w, self.enc_b, self.emb_size)

    def get_cluster_prob(self, embeddings):
        return cluster_prob(embeddings, self.c_t_pad, self.c_sq_pad,
                            self.alpha, self.n_clusters)

    def contrast_logits(self, embd1, embd2=None):
        if embd2 is None:
            return contrast_head(embd1, self.ch_w1, self.ch_b1,
                                 self.ch_w2, self.ch_b2)
        # batch both head calls into one kernel launch (weights DMAed once)
        n1 = embd1.shape[0]
        both = jnp.concatenate([embd1, embd2], axis=0)
        f = contrast_head(both, self.ch_w1, self.ch_b1, self.ch_w2, self.ch_b2)
        return f[:n1], f[n1:]

    def local_consistency(self, embd0, embd1, embd2, criterion):
        # batch the three cluster-prob calls into one kernel launch
        n = embd0.shape[0]
        stacked = jnp.concatenate([embd0, embd1, embd2], axis=0)
        p = self.get_cluster_prob(stacked)
        p0, p1, p2 = p[:n], p[n:2 * n], p[2 * n:]
        return criterion(p1, p0) + criterion(p2, p0)


# ----------------------------------------------------------------------------
# Reference (plain JAX) implementations for verification
# ----------------------------------------------------------------------------
# References mirror the bf16 rounding of the MXU operands (weights are stored
# bf16 / bf16-representable) but do the normalizations with exact division, so
# tolerances are set to cover the approx-reciprocal EUP path used in-kernel.

def _ref_bert(model, input_ids):
    x = model.tok_emb[input_ids]                                  # (B, L, Dp) f32
    w = model.enc_w.astype(jnp.float32)
    h = jnp.tanh(x @ w + model.enc_b)
    return h[:, :, :model.emb_size]


def _ref_mean(hidden, mask):
    m = mask[..., None].astype(jnp.float32)
    return jnp.sum(hidden * m, axis=1) / jnp.sum(m, axis=1)


def _ref_cluster(e, centers, alpha):
    ns = jnp.sum((e[:, None, :] - centers[None, :, :]) ** 2, axis=2)
    num = (1.0 / (1.0 + ns / alpha)) ** ((alpha + 1.0) / 2.0)
    return num / jnp.sum(num, axis=1, keepdims=True)


def _ref_contrast(model, x):
    Dp = model.ch_w1.shape[0]
    xb = x.astype(jnp.bfloat16).astype(jnp.float32)
    xb = jnp.pad(xb, ((0, 0), (0, Dp - xb.shape[1])))
    h = jnp.maximum(xb @ model.ch_w1.astype(jnp.float32) + model.ch_b1, 0.0)
    hb = h.astype(jnp.bfloat16).astype(jnp.float32)
    f = hb @ model.ch_w2.astype(jnp.float32) + model.ch_b2
    return f / jnp.maximum(jnp.sqrt(jnp.sum(f * f, axis=1, keepdims=True)), 1e-12)


# ----------------------------------------------------------------------------

if __name__ == "__main__":
    key = jax.random.PRNGKey(0)
    k_model, k_ids, k_centers, k_e0, k_e1, k_e2 = jax.random.split(key, 6)

    B, L, D, K, V = 2, 8, 32, 4, 100
    centers = jax.random.normal(k_centers, (K, D), jnp.float32)
    model = SCCLCyclicPallas(k_model, vocab_size=V, emb_size=D,
                             cluster_centers=centers, alpha=1.0)

    input_ids = jax.random.randint(k_ids, (B, L), 0, V)
    attention_mask = jnp.array([[1, 1, 1, 1, 1, 0, 0, 0],
                                [1, 1, 1, 1, 1, 1, 1, 1]], jnp.float32)

    # forward = bert(data_batch)
    hidden = model.forward(input_ids)[0]

    # fused gather + encoder + masked mean pooling
    mean_emb = model.get_mean_embeddings(input_ids, attention_mask)

    # cluster probabilities + batched contrast logits on two augmented embeddings
    e0 = jax.random.normal(k_e0, (B, D), jnp.float32)
    e1 = jax.random.normal(k_e1, (B, D), jnp.float32)
    e2 = jax.random.normal(k_e2, (B, D), jnp.float32)
    probs = model.get_cluster_prob(e1)
    f1, f2 = model.contrast_logits(e1, e2)

    # local consistency with a simple KL criterion (glue, not a kernel)
    def kl_criterion(p, q):
        return jnp.sum(p * (jnp.log(p + 1e-12) - jnp.log(q + 1e-12)))

    lc = model.local_consistency(e0, e1, e2, kl_criterion)

    jax.block_until_ready((hidden, mean_emb, probs, f1, f2, lc))

    # ---- verify against plain-JAX references ----
    ref_hidden = _ref_bert(model, input_ids)
    np.testing.assert_allclose(np.asarray(hidden), np.asarray(ref_hidden),
                               atol=1e-4, rtol=1e-4)
    np.testing.assert_allclose(np.asarray(mean_emb),
                               np.asarray(_ref_mean(ref_hidden, attention_mask)),
                               atol=5e-3, rtol=5e-3)       # approx reciprocal
    np.testing.assert_allclose(np.asarray(probs),
                               np.asarray(_ref_cluster(e1, centers, 1.0)),
                               atol=5e-3, rtol=5e-3)       # approx reciprocal x2
    np.testing.assert_allclose(np.asarray(f1), np.asarray(_ref_contrast(model, e1)),
                               atol=2e-3, rtol=2e-3)
    np.testing.assert_allclose(np.asarray(f2), np.asarray(_ref_contrast(model, e2)),
                               atol=2e-3, rtol=2e-3)
    ref_lc = (kl_criterion(_ref_cluster(e1, centers, 1.0), _ref_cluster(e0, centers, 1.0))
              + kl_criterion(_ref_cluster(e2, centers, 1.0), _ref_cluster(e0, centers, 1.0)))
    np.testing.assert_allclose(np.asarray(lc), np.asarray(ref_lc),
                               atol=5e-2, rtol=5e-2)

    print("KERNEL_OK")
</pallas_src>

<mosaic_0001>
module attributes {stable_mosaic.version = 11 : i64} {
  func.func @_encode_kernel(%arg0: i32, %arg1: memref<2x8xi32, #tpu.memory_space<smem>>, %arg2: memref<100x128xf32, #tpu.memory_space<any>>, %arg3: memref<128x128xbf16, #tpu.memory_space<vmem>>, %arg4: memref<1x128xf32, #tpu.memory_space<vmem>>, %arg5: memref<1x8x128xf32, #tpu.memory_space<vmem>>, %arg6: memref<8x128xf32, #tpu.memory_space<vmem>>, %arg7: memref<8x!tpu.dma_semaphore, #tpu.memory_space<semaphore_mem>>) attributes {dimension_semantics = [#tpu.dimension_semantics<parallel>], iteration_bounds = array<i64: 2>, scalar_prefetch = 1 : i64, scratch_operands = 2 : i64, tpu.core_type = #tpu.core_type<tc>, window_params = [{}, {pipeline_mode = #tpu.pipeline_mode<synchronous>, transform_indices = @transform_1, window_bounds = array<i64: 128, 128>}, {pipeline_mode = #tpu.pipeline_mode<synchronous>, transform_indices = @transform_2, window_bounds = array<i64: 1, 128>}, {transform_indices = @transform_3, window_bounds = array<i64: 1, 8, 128>}]} {
    %0 = arith.index_cast %arg0 : i32 to index
    %c0 = arith.constant 0 : index
    %1 = memref.load %arg1[%0, %c0] : memref<2x8xi32, #tpu.memory_space<smem>>
    %c0_i32 = arith.constant 0 : i32
    %c99_i32 = arith.constant 99 : i32
    %2 = arith.maxsi %c0_i32, %1 : i32
    %3 = arith.minsi %c99_i32, %2 : i32
    %c0_i32_0 = arith.constant 0 : i32
    %c0_i32_1 = arith.constant 0 : i32
    %4 = tpu.memref_slice %arg2[%3, %c0_i32_1] : memref<100x128xf32, #tpu.memory_space<any>> -> memref<1x128xf32, #tpu.memory_space<any>>
    %c0_i32_2 = arith.constant 0 : i32
    %c0_i32_3 = arith.constant 0 : i32
    %5 = tpu.memref_slice %arg6[%c0_i32_2, %c0_i32_3] : memref<8x128xf32, #tpu.memory_space<vmem>> -> memref<1x128xf32, #tpu.memory_space<vmem>>
    %6 = tpu.memref_slice %arg7[%c0_i32_0] : memref<8x!tpu.dma_semaphore, #tpu.memory_space<semaphore_mem>> -> memref<1x!tpu.dma_semaphore, #tpu.memory_space<semaphore_mem>>
    %7 = tpu.memref_squeeze %6 : memref<1x!tpu.dma_semaphore, #tpu.memory_space<semaphore_mem>> -> memref<!tpu.dma_semaphore, #tpu.memory_space<semaphore_mem>>
    tpu.enqueue_dma source(%4 : memref<1x128xf32, #tpu.memory_space<any>>) target(%5 : memref<1x128xf32, #tpu.memory_space<vmem>>) target_semaphore(%7 : memref<!tpu.dma_semaphore, #tpu.memory_space<semaphore_mem>>)
    %8 = arith.index_cast %arg0 : i32 to index
    %c1 = arith.constant 1 : index
    %9 = memref.load %arg1[%8, %c1] : memref<2x8xi32, #tpu.memory_space<smem>>
    %c0_i32_4 = arith.constant 0 : i32
    %c99_i32_5 = arith.constant 99 : i32
    %10 = arith.maxsi %c0_i32_4, %9 : i32
    %11 = arith.minsi %c99_i32_5, %10 : i32
    %c1_i32 = arith.constant 1 : i32
    %c0_i32_6 = arith.constant 0 : i32
    %12 = tpu.memref_slice %arg2[%11, %c0_i32_6] : memref<100x128xf32, #tpu.memory_space<any>> -> memref<1x128xf32, #tpu.memory_space<any>>
    %c1_i32_7 = arith.constant 1 : i32
    %c0_i32_8 = arith.constant 0 : i32
    %13 = tpu.memref_slice %arg6[%c1_i32_7, %c0_i32_8] : memref<8x128xf32, #tpu.memory_space<vmem>> -> memref<1x128xf32, #tpu.memory_space<vmem>>
    %14 = tpu.memref_slice %arg7[%c1_i32] : memref<8x!tpu.dma_semaphore, #tpu.memory_space<semaphore_mem>> -> memref<1x!tpu.dma_semaphore, #tpu.memory_space<semaphore_mem>>
    %15 = tpu.memref_squeeze %14 : memref<1x!tpu.dma_semaphore, #tpu.memory_space<semaphore_mem>> -> memref<!tpu.dma_semaphore, #tpu.memory_space<semaphore_mem>>
    tpu.enqueue_dma source(%12 : memref<1x128xf32, #tpu.memory_space<any>>) target(%13 : memref<1x128xf32, #tpu.memory_space<vmem>>) target_semaphore(%15 : memref<!tpu.dma_semaphore, #tpu.memory_space<semaphore_mem>>)
    %16 = arith.index_cast %arg0 : i32 to index
    %c2 = arith.constant 2 : index
    %17 = memref.load %arg1[%16, %c2] : memref<2x8xi32, #tpu.memory_space<smem>>
    %c0_i32_9 = arith.constant 0 : i32
    %c99_i32_10 = arith.constant 99 : i32
    %18 = arith.maxsi %c0_i32_9, %17 : i32
    %19 = arith.minsi %c99_i32_10, %18 : i32
    %c2_i32 = arith.constant 2 : i32
    %c0_i32_11 = arith.constant 0 : i32
    %20 = tpu.memref_slice %arg2[%19, %c0_i32_11] : memref<100x128xf32, #tpu.memory_space<any>> -> memref<1x128xf32, #tpu.memory_space<any>>
    %c2_i32_12 = arith.constant 2 : i32
    %c0_i32_13 = arith.constant 0 : i32
    %21 = tpu.memref_slice %arg6[%c2_i32_12, %c0_i32_13] : memref<8x128xf32, #tpu.memory_space<vmem>> -> memref<1x128xf32, #tpu.memory_space<vmem>>
    %22 = tpu.memref_slice %arg7[%c2_i32] : memref<8x!tpu.dma_semaphore, #tpu.memory_space<semaphore_mem>> -> memref<1x!tpu.dma_semaphore, #tpu.memory_space<semaphore_mem>>
    %23 = tpu.memref_squeeze %22 : memref<1x!tpu.dma_semaphore, #tpu.memory_space<semaphore_mem>> -> memref<!tpu.dma_semaphore, #tpu.memory_space<semaphore_mem>>
    tpu.enqueue_dma source(%20 : memref<1x128xf32, #tpu.memory_space<any>>) target(%21 : memref<1x128xf32, #tpu.memory_space<vmem>>) target_semaphore(%23 : memref<!tpu.dma_semaphore, #tpu.memory_space<semaphore_mem>>)
    %24 = arith.index_cast %arg0 : i32 to index
    %c3 = arith.constant 3 : index
    %25 = memref.load %arg1[%24, %c3] : memref<2x8xi32, #tpu.memory_space<smem>>
    %c0_i32_14 = arith.constant 0 : i32
    %c99_i32_15 = arith.constant 99 : i32
    %26 = arith.maxsi %c0_i32_14, %25 : i32
    %27 = arith.minsi %c99_i32_15, %26 : i32
    %c3_i32 = arith.constant 3 : i32
    %c0_i32_16 = arith.constant 0 : i32
    %28 = tpu.memref_slice %arg2[%27, %c0_i32_16] : memref<100x128xf32, #tpu.memory_space<any>> -> memref<1x128xf32, #tpu.memory_space<any>>
    %c3_i32_17 = arith.constant 3 : i32
    %c0_i32_18 = arith.constant 0 : i32
    %29 = tpu.memref_slice %arg6[%c3_i32_17, %c0_i32_18] : memref<8x128xf32, #tpu.memory_space<vmem>> -> memref<1x128xf32, #tpu.memory_space<vmem>>
    %30 = tpu.memref_slice %arg7[%c3_i32] : memref<8x!tpu.dma_semaphore, #tpu.memory_space<semaphore_mem>> -> memref<1x!tpu.dma_semaphore, #tpu.memory_space<semaphore_mem>>
    %31 = tpu.memref_squeeze %30 : memref<1x!tpu.dma_semaphore, #tpu.memory_space<semaphore_mem>> -> memref<!tpu.dma_semaphore, #tpu.memory_space<semaphore_mem>>
    tpu.enqueue_dma source(%28 : memref<1x128xf32, #tpu.memory_space<any>>) target(%29 : memref<1x128xf32, #tpu.memory_space<vmem>>) target_semaphore(%31 : memref<!tpu.dma_semaphore, #tpu.memory_space<semaphore_mem>>)
    %32 = arith.index_cast %arg0 : i32 to index
    %c4 = arith.constant 4 : index
    %33 = memref.load %arg1[%32, %c4] : memref<2x8xi32, #tpu.memory_space<smem>>
    %c0_i32_19 = arith.constant 0 : i32
    %c99_i32_20 = arith.constant 99 : i32
    %34 = arith.maxsi %c0_i32_19, %33 : i32
    %35 = arith.minsi %c99_i32_20, %34 : i32
    %c4_i32 = arith.constant 4 : i32
    %c0_i32_21 = arith.constant 0 : i32
    %36 = tpu.memref_slice %arg2[%35, %c0_i32_21] : memref<100x128xf32, #tpu.memory_space<any>> -> memref<1x128xf32, #tpu.memory_space<any>>
    %c4_i32_22 = arith.constant 4 : i32
    %c0_i32_23 = arith.constant 0 : i32
    %37 = tpu.memref_slice %arg6[%c4_i32_22, %c0_i32_23] : memref<8x128xf32, #tpu.memory_space<vmem>> -> memref<1x128xf32, #tpu.memory_space<vmem>>
    %38 = tpu.memref_slice %arg7[%c4_i32] : memref<8x!tpu.dma_semaphore, #tpu.memory_space<semaphore_mem>> -> memref<1x!tpu.dma_semaphore, #tpu.memory_space<semaphore_mem>>
    %39 = tpu.memref_squeeze %38 : memref<1x!tpu.dma_semaphore, #tpu.memory_space<semaphore_mem>> -> memref<!tpu.dma_semaphore, #tpu.memory_space<semaphore_mem>>
    tpu.enqueue_dma source(%36 : memref<1x128xf32, #tpu.memory_space<any>>) target(%37 : memref<1x128xf32, #tpu.memory_space<vmem>>) target_semaphore(%39 : memref<!tpu.dma_semaphore, #tpu.memory_space<semaphore_mem>>)
    %40 = arith.index_cast %arg0 : i32 to index
    %c5 = arith.constant 5 : index
    %41 = memref.load %arg1[%40, %c5] : memref<2x8xi32, #tpu.memory_space<smem>>
    %c0_i32_24 = arith.constant 0 : i32
    %c99_i32_25 = arith.constant 99 : i32
    %42 = arith.maxsi %c0_i32_24, %41 : i32
    %43 = arith.minsi %c99_i32_25, %42 : i32
    %c5_i32 = arith.constant 5 : i32
    %c0_i32_26 = arith.constant 0 : i32
    %44 = tpu.memref_slice %arg2[%43, %c0_i32_26] : memref<100x128xf32, #tpu.memory_space<any>> -> memref<1x128xf32, #tpu.memory_space<any>>
    %c5_i32_27 = arith.constant 5 : i32
    %c0_i32_28 = arith.constant 0 : i32
    %45 = tpu.memref_slice %arg6[%c5_i32_27, %c0_i32_28] : memref<8x128xf32, #tpu.memory_space<vmem>> -> memref<1x128xf32, #tpu.memory_space<vmem>>
    %46 = tpu.memref_slice %arg7[%c5_i32] : memref<8x!tpu.dma_semaphore, #tpu.memory_space<semaphore_mem>> -> memref<1x!tpu.dma_semaphore, #tpu.memory_space<semaphore_mem>>
    %47 = tpu.memref_squeeze %46 : memref<1x!tpu.dma_semaphore, #tpu.memory_space<semaphore_mem>> -> memref<!tpu.dma_semaphore, #tpu.memory_space<semaphore_mem>>
    tpu.enqueue_dma source(%44 : memref<1x128xf32, #tpu.memory_space<any>>) target(%45 : memref<1x128xf32, #tpu.memory_space<vmem>>) target_semaphore(%47 : memref<!tpu.dma_semaphore, #tpu.memory_space<semaphore_mem>>)
    %48 = arith.index_cast %arg0 : i32 to index
    %c6 = arith.constant 6 : index
    %49 = memref.load %arg1[%48, %c6] : memref<2x8xi32, #tpu.memory_space<smem>>
    %c0_i32_29 = arith.constant 0 : i32
    %c99_i32_30 = arith.constant 99 : i32
    %50 = arith.maxsi %c0_i32_29, %49 : i32
    %51 = arith.minsi %c99_i32_30, %50 : i32
    %c6_i32 = arith.constant 6 : i32
    %c0_i32_31 = arith.constant 0 : i32
    %52 = tpu.memref_slice %arg2[%51, %c0_i32_31] : memref<100x128xf32, #tpu.memory_space<any>> -> memref<1x128xf32, #tpu.memory_space<any>>
    %c6_i32_32 = arith.constant 6 : i32
    %c0_i32_33 = arith.constant 0 : i32
    %53 = tpu.memref_slice %arg6[%c6_i32_32, %c0_i32_33] : memref<8x128xf32, #tpu.memory_space<vmem>> -> memref<1x128xf32, #tpu.memory_space<vmem>>
    %54 = tpu.memref_slice %arg7[%c6_i32] : memref<8x!tpu.dma_semaphore, #tpu.memory_space<semaphore_mem>> -> memref<1x!tpu.dma_semaphore, #tpu.memory_space<semaphore_mem>>
    %55 = tpu.memref_squeeze %54 : memref<1x!tpu.dma_semaphore, #tpu.memory_space<semaphore_mem>> -> memref<!tpu.dma_semaphore, #tpu.memory_space<semaphore_mem>>
    tpu.enqueue_dma source(%52 : memref<1x128xf32, #tpu.memory_space<any>>) target(%53 : memref<1x128xf32, #tpu.memory_space<vmem>>) target_semaphore(%55 : memref<!tpu.dma_semaphore, #tpu.memory_space<semaphore_mem>>)
    %56 = arith.index_cast %arg0 : i32 to index
    %c7 = arith.constant 7 : index
    %57 = memref.load %arg1[%56, %c7] : memref<2x8xi32, #tpu.memory_space<smem>>
    %c0_i32_34 = arith.constant 0 : i32
    %c99_i32_35 = arith.constant 99 : i32
    %58 = arith.maxsi %c0_i32_34, %57 : i32
    %59 = arith.minsi %c99_i32_35, %58 : i32
    %c7_i32 = arith.constant 7 : i32
    %c0_i32_36 = arith.constant 0 : i32
    %60 = tpu.memref_slice %arg2[%59, %c0_i32_36] : memref<100x128xf32, #tpu.memory_space<any>> -> memref<1x128xf32, #tpu.memory_space<any>>
    %c7_i32_37 = arith.constant 7 : i32
    %c0_i32_38 = arith.constant 0 : i32
    %61 = tpu.memref_slice %arg6[%c7_i32_37, %c0_i32_38] : memref<8x128xf32, #tpu.memory_space<vmem>> -> memref<1x128xf32, #tpu.memory_space<vmem>>
    %62 = tpu.memref_slice %arg7[%c7_i32] : memref<8x!tpu.dma_semaphore, #tpu.memory_space<semaphore_mem>> -> memref<1x!tpu.dma_semaphore, #tpu.memory_space<semaphore_mem>>
    %63 = tpu.memref_squeeze %62 : memref<1x!tpu.dma_semaphore, #tpu.memory_space<semaphore_mem>> -> memref<!tpu.dma_semaphore, #tpu.memory_space<semaphore_mem>>
    tpu.enqueue_dma source(%60 : memref<1x128xf32, #tpu.memory_space<any>>) target(%61 : memref<1x128xf32, #tpu.memory_space<vmem>>) target_semaphore(%63 : memref<!tpu.dma_semaphore, #tpu.memory_space<semaphore_mem>>)
    %c0_i32_39 = arith.constant 0 : i32
    %c0_i32_40 = arith.constant 0 : i32
    %64 = tpu.memref_slice %arg2[%3, %c0_i32_40] : memref<100x128xf32, #tpu.memory_space<any>> -> memref<1x128xf32, #tpu.memory_space<any>>
    %c0_i32_41 = arith.constant 0 : i32
    %c0_i32_42 = arith.constant 0 : i32
    %65 = tpu.memref_slice %arg6[%c0_i32_41, %c0_i32_42] : memref<8x128xf32, #tpu.memory_space<vmem>> -> memref<1x128xf32, #tpu.memory_space<vmem>>
    %66 = tpu.memref_slice %arg7[%c0_i32_39] : memref<8x!tpu.dma_semaphore, #tpu.memory_space<semaphore_mem>> -> memref<1x!tpu.dma_semaphore, #tpu.memory_space<semaphore_mem>>
    %67 = tpu.memref_squeeze %66 : memref<1x!tpu.dma_semaphore, #tpu.memory_space<semaphore_mem>> -> memref<!tpu.dma_semaphore, #tpu.memory_space<semaphore_mem>>
    tpu.wait_dma2 semaphore(%67 : memref<!tpu.dma_semaphore, #tpu.memory_space<semaphore_mem>>) src(%64 : memref<1x128xf32, #tpu.memory_space<any>>) dst(%65 : memref<1x128xf32, #tpu.memory_space<vmem>>)
    %c1_i32_43 = arith.constant 1 : i32
    %c0_i32_44 = arith.constant 0 : i32
    %68 = tpu.memref_slice %arg2[%11, %c0_i32_44] : memref<100x128xf32, #tpu.memory_space<any>> -> memref<1x128xf32, #tpu.memory_space<any>>
    %c1_i32_45 = arith.constant 1 : i32
    %c0_i32_46 = arith.constant 0 : i32
    %69 = tpu.memref_slice %arg6[%c1_i32_45, %c0_i32_46] : memref<8x128xf32, #tpu.memory_space<vmem>> -> memref<1x128xf32, #tpu.memory_space<vmem>>
    %70 = tpu.memref_slice %arg7[%c1_i32_43] : memref<8x!tpu.dma_semaphore, #tpu.memory_space<semaphore_mem>> -> memref<1x!tpu.dma_semaphore, #tpu.memory_space<semaphore_mem>>
    %71 = tpu.memref_squeeze %70 : memref<1x!tpu.dma_semaphore, #tpu.memory_space<semaphore_mem>> -> memref<!tpu.dma_semaphore, #tpu.memory_space<semaphore_mem>>
    tpu.wait_dma2 semaphore(%71 : memref<!tpu.dma_semaphore, #tpu.memory_space<semaphore_mem>>) src(%68 : memref<1x128xf32, #tpu.memory_space<any>>) dst(%69 : memref<1x128xf32, #tpu.memory_space<vmem>>)
    %c2_i32_47 = arith.constant 2 : i32
    %c0_i32_48 = arith.constant 0 : i32
    %72 = tpu.memref_slice %arg2[%19, %c0_i32_48] : memref<100x128xf32, #tpu.memory_space<any>> -> memref<1x128xf32, #tpu.memory_space<any>>
    %c2_i32_49 = arith.constant 2 : i32
    %c0_i32_50 = arith.constant 0 : i32
    %73 = tpu.memref_slice %arg6[%c2_i32_49, %c0_i32_50] : memref<8x128xf32, #tpu.memory_space<vmem>> -> memref<1x128xf32, #tpu.memory_space<vmem>>
    %74 = tpu.memref_slice %arg7[%c2_i32_47] : memref<8x!tpu.dma_semaphore, #tpu.memory_space<semaphore_mem>> -> memref<1x!tpu.dma_semaphore, #tpu.memory_space<semaphore_mem>>
    %75 = tpu.memref_squeeze %74 : memref<1x!tpu.dma_semaphore, #tpu.memory_space<semaphore_mem>> -> memref<!tpu.dma_semaphore, #tpu.memory_space<semaphore_mem>>
    tpu.wait_dma2 semaphore(%75 : memref<!tpu.dma_semaphore, #tpu.memory_space<semaphore_mem>>) src(%72 : memref<1x128xf32, #tpu.memory_space<any>>) dst(%73 : memref<1x128xf32, #tpu.memory_space<vmem>>)
    %c3_i32_51 = arith.constant 3 : i32
    %c0_i32_52 = arith.constant 0 : i32
    %76 = tpu.memref_slice %arg2[%27, %c0_i32_52] : memref<100x128xf32, #tpu.memory_space<any>> -> memref<1x128xf32, #tpu.memory_space<any>>
    %c3_i32_53 = arith.constant 3 : i32
    %c0_i32_54 = arith.constant 0 : i32
    %77 = tpu.memref_slice %arg6[%c3_i32_53, %c0_i32_54] : memref<8x128xf32, #tpu.memory_space<vmem>> -> memref<1x128xf32, #tpu.memory_space<vmem>>
    %78 = tpu.memref_slice %arg7[%c3_i32_51] : memref<8x!tpu.dma_semaphore, #tpu.memory_space<semaphore_mem>> -> memref<1x!tpu.dma_semaphore, #tpu.memory_space<semaphore_mem>>
    %79 = tpu.memref_squeeze %78 : memref<1x!tpu.dma_semaphore, #tpu.memory_space<semaphore_mem>> -> memref<!tpu.dma_semaphore, #tpu.memory_space<semaphore_mem>>
    tpu.wait_dma2 semaphore(%79 : memref<!tpu.dma_semaphore, #tpu.memory_space<semaphore_mem>>) src(%76 : memref<1x128xf32, #tpu.memory_space<any>>) dst(%77 : memref<1x128xf32, #tpu.memory_space<vmem>>)
    %c4_i32_55 = arith.constant 4 : i32
    %c0_i32_56 = arith.constant 0 : i32
    %80 = tpu.memref_slice %arg2[%35, %c0_i32_56] : memref<100x128xf32, #tpu.memory_space<any>> -> memref<1x128xf32, #tpu.memory_space<any>>
    %c4_i32_57 = arith.constant 4 : i32
    %c0_i32_58 = arith.constant 0 : i32
    %81 = tpu.memref_slice %arg6[%c4_i32_57, %c0_i32_58] : memref<8x128xf32, #tpu.memory_space<vmem>> -> memref<1x128xf32, #tpu.memory_space<vmem>>
    %82 = tpu.memref_slice %arg7[%c4_i32_55] : memref<8x!tpu.dma_semaphore, #tpu.memory_space<semaphore_mem>> -> memref<1x!tpu.dma_semaphore, #tpu.memory_space<semaphore_mem>>
    %83 = tpu.memref_squeeze %82 : memref<1x!tpu.dma_semaphore, #tpu.memory_space<semaphore_mem>> -> memref<!tpu.dma_semaphore, #tpu.memory_space<semaphore_mem>>
    tpu.wait_dma2 semaphore(%83 : memref<!tpu.dma_semaphore, #tpu.memory_space<semaphore_mem>>) src(%80 : memref<1x128xf32, #tpu.memory_space<any>>) dst(%81 : memref<1x128xf32, #tpu.memory_space<vmem>>)
    %c5_i32_59 = arith.constant 5 : i32
    %c0_i32_60 = arith.constant 0 : i32
    %84 = tpu.memref_slice %arg2[%43, %c0_i32_60] : memref<100x128xf32, #tpu.memory_space<any>> -> memref<1x128xf32, #tpu.memory_space<any>>
    %c5_i32_61 = arith.constant 5 : i32
    %c0_i32_62 = arith.constant 0 : i32
    %85 = tpu.memref_slice %arg6[%c5_i32_61, %c0_i32_62] : memref<8x128xf32, #tpu.memory_space<vmem>> -> memref<1x128xf32, #tpu.memory_space<vmem>>
    %86 = tpu.memref_slice %arg7[%c5_i32_59] : memref<8x!tpu.dma_semaphore, #tpu.memory_space<semaphore_mem>> -> memref<1x!tpu.dma_semaphore, #tpu.memory_space<semaphore_mem>>
    %87 = tpu.memref_squeeze %86 : memref<1x!tpu.dma_semaphore, #tpu.memory_space<semaphore_mem>> -> memref<!tpu.dma_semaphore, #tpu.memory_space<semaphore_mem>>
    tpu.wait_dma2 semaphore(%87 : memref<!tpu.dma_semaphore, #tpu.memory_space<semaphore_mem>>) src(%84 : memref<1x128xf32, #tpu.memory_space<any>>) dst(%85 : memref<1x128xf32, #tpu.memory_space<vmem>>)
    %c6_i32_63 = arith.constant 6 : i32
    %c0_i32_64 = arith.constant 0 : i32
    %88 = tpu.memref_slice %arg2[%51, %c0_i32_64] : memref<100x128xf32, #tpu.memory_space<any>> -> memref<1x128xf32, #tpu.memory_space<any>>
    %c6_i32_65 = arith.constant 6 : i32
    %c0_i32_66 = arith.constant 0 : i32
    %89 = tpu.memref_slice %arg6[%c6_i32_65, %c0_i32_66] : memref<8x128xf32, #tpu.memory_space<vmem>> -> memref<1x128xf32, #tpu.memory_space<vmem>>
    %90 = tpu.memref_slice %arg7[%c6_i32_63] : memref<8x!tpu.dma_semaphore, #tpu.memory_space<semaphore_mem>> -> memref<1x!tpu.dma_semaphore, #tpu.memory_space<semaphore_mem>>
    %91 = tpu.memref_squeeze %90 : memref<1x!tpu.dma_semaphore, #tpu.memory_space<semaphore_mem>> -> memref<!tpu.dma_semaphore, #tpu.memory_space<semaphore_mem>>
    tpu.wait_dma2 semaphore(%91 : memref<!tpu.dma_semaphore, #tpu.memory_space<semaphore_mem>>) src(%88 : memref<1x128xf32, #tpu.memory_space<any>>) dst(%89 : memref<1x128xf32, #tpu.memory_space<vmem>>)
    %c7_i32_67 = arith.constant 7 : i32
    %c0_i32_68 = arith.constant 0 : i32
    %92 = tpu.memref_slice %arg2[%59, %c0_i32_68] : memref<100x128xf32, #tpu.memory_space<any>> -> memref<1x128xf32, #tpu.memory_space<any>>
    %c7_i32_69 = arith.constant 7 : i32
    %c0_i32_70 = arith.constant 0 : i32
    %93 = tpu.memref_slice %arg6[%c7_i32_69, %c0_i32_70] : memref<8x128xf32, #tpu.memory_space<vmem>> -> memref<1x128xf32, #tpu.memory_space<vmem>>
    %94 = tpu.memref_slice %arg7[%c7_i32_67] : memref<8x!tpu.dma_semaphore, #tpu.memory_space<semaphore_mem>> -> memref<1x!tpu.dma_semaphore, #tpu.memory_space<semaphore_mem>>
    %95 = tpu.memref_squeeze %94 : memref<1x!tpu.dma_semaphore, #tpu.memory_space<semaphore_mem>> -> memref<!tpu.dma_semaphore, #tpu.memory_space<semaphore_mem>>
    tpu.wait_dma2 semaphore(%95 : memref<!tpu.dma_semaphore, #tpu.memory_space<semaphore_mem>>) src(%92 : memref<1x128xf32, #tpu.memory_space<any>>) dst(%93 : memref<1x128xf32, #tpu.memory_space<vmem>>)
    %c0_71 = arith.constant 0 : index
    %c0_72 = arith.constant 0 : index
    %96 = vector.load %arg6[%c0_71, %c0_72] : memref<8x128xf32, #tpu.memory_space<vmem>>, vector<8x128xf32>
    %97 = arith.truncf %96 : vector<8x128xf32> to vector<8x128xbf16>
    %c0_73 = arith.constant 0 : index
    %c0_74 = arith.constant 0 : index
    %98 = vector.load %arg3[%c0_73, %c0_74] : memref<128x128xbf16, #tpu.memory_space<vmem>>, vector<128x128xbf16>
    %cst = arith.constant dense<0.000000e+00> : vector<8x128xf32>
    %99 = tpu.matmul %97, %98, %cst {dimension_numbers = #tpu.dot_dimension_numbers<[1], [0], [0], [1], [0, 0, 1, 1], [], []>} : vector<8x128xbf16>, vector<128x128xbf16>, vector<8x128xf32> -> vector<8x128xf32>
    %c0_75 = arith.constant 0 : index
    %c0_76 = arith.constant 0 : index
    %100 = vector.load %arg4[%c0_75, %c0_76] : memref<1x128xf32, #tpu.memory_space<vmem>>, vector<1x128xf32>
    %101 = vector.broadcast %100 : vector<1x128xf32> to vector<8x128xf32>
    %102 = arith.addf %99, %101 : vector<8x128xf32>
    %103 = math.tanh %102 : vector<8x128xf32>
    %104 = vector.shape_cast %103 : vector<8x128xf32> to vector<1x8x128xf32>
    %c0_77 = arith.constant 0 : index
    %c0_78 = arith.constant 0 : index
    %c0_79 = arith.constant 0 : index
    %105 = vector.load %arg5[%c0_77, %c0_78, %c0_79] : memref<1x8x128xf32, #tpu.memory_space<vmem>>, vector<1x8x128xf32>
    tpu.vector_store %arg5[%c0_77, %c0_78, %c0_79], %104 {strides = array<i32>} : memref<1x8x128xf32, #tpu.memory_space<vmem>>, vector<1x8x128xf32>,
    return
  }
  func.func @transform_1(%arg0: i32, %arg1: memref<2x8xi32, #tpu.memory_space<smem>>) -> (i32, i32) {
    %c0_i32 = arith.constant 0 : i32
    %c0_i32_0 = arith.constant 0 : i32
    %c0_i32_1 = arith.constant 0 : i32
    return %c0_i32, %c0_i32_0 : i32, i32
  }
  func.func @transform_2(%arg0: i32, %arg1: memref<2x8xi32, #tpu.memory_space<smem>>) -> (i32, i32) {
    %c0_i32 = arith.constant 0 : i32
    %c0_i32_0 = arith.constant 0 : i32
    %c0_i32_1 = arith.constant 0 : i32
    return %c0_i32, %c0_i32_0 : i32, i32
  }
  func.func @transform_3(%arg0: i32, %arg1: memref<2x8xi32, #tpu.memory_space<smem>>) -> (i32, i32, i32) {
    %c0_i32 = arith.constant 0 : i32
    %c0_i32_0 = arith.constant 0 : i32
    %c0_i32_1 = arith.constant 0 : i32
    return %arg0, %c0_i32, %c0_i32_0 : i32, i32, i32
  }
}

</mosaic_0001>

<llo_original>
// kernel: tpu_custom_call.1
$region0: #{tpu_custom_call.1}
  #allocation0 [shape = 'u32[]', space=smem, size = 0x4, offset = 0x4, fixed_abs, tag = 'smem constant byte address 0x4 - core index']
  #allocation1 [shape = 'u32[144,128]{1,0:T(1,128)}', space=vmem, size = 0x12000, scoped, tag = 'internal scratch']
  #allocation2 [shape = 'f32[8,128]{1,0:T(8,128)}', space=vmem, size = 0x1000, scoped, tag = 'scratch operand']
  #allocation3 [shape = 's32[8]{0}', space=sflag, size = 0x20, scoped, tag = 'scratch operand']
  #allocation4 [shape = 's32[1]{0}', space=sflag, size = 0x4, scoped, tag = 'scoped memory for tpu_custom_call.1']
  #allocation5 [shape = 'u8[1024]{0}', space=smem, size = 0x400, scoped, tag = 'prefetched SMEM operand 0']
  #allocation10 [shape = 's32[]', space=sflag, size = 0x4, offset = 0, fixed_abs, tag = 'sflag constant byte address 0x0 - dummy sync flag']
  #allocation11 [shape = 's32[]', space=sflag, size = 0x4, offset = 0, fixed_abs, tag = 'sflag constant byte address 0x0 - dummy sync flag']
  #allocation12 [shape = 'u32[]', space=smem, size = 0x4, offset = 0x44, fixed_abs, tag = 'smem constant byte address 0x44 - assertion arg 0']
  #allocation13 [shape = 'u32[]', space=smem, size = 0x4, offset = 0x48, fixed_abs, tag = 'smem constant byte address 0x48 - assertion arg 1']
  #allocation14 [shape = 's32[]', space=sflag, size = 0x4, offset = 0, fixed_abs, tag = 'sflag constant byte address 0x0 - dummy sync flag']
  #allocation15 [shape = 's32[]', space=sflag, size = 0x4, offset = 0, fixed_abs, tag = 'sflag constant byte address 0x0 - dummy sync flag']
  #allocation16 [shape = 's32[]', space=sflag, size = 0x4, offset = 0, fixed_abs, tag = 'sflag constant byte address 0x0 - dummy sync flag']
  #allocation17 [shape = 's32[]', space=sflag, size = 0x4, offset = 0, fixed_abs, tag = 'sflag constant byte address 0x0 - dummy sync flag']
  #allocation18 [shape = 's32[]', space=sflag, size = 0x4, offset = 0, fixed_abs, tag = 'sflag constant byte address 0x0 - dummy sync flag']
  #allocation19 [shape = 's32[]', space=sflag, size = 0x4, offset = 0, fixed_abs, tag = 'sflag constant byte address 0x0 - dummy sync flag']
  #allocation20 [shape = 's32[]', space=sflag, size = 0x4, offset = 0, fixed_abs, tag = 'sflag constant byte address 0x0 - dummy sync flag']
  #allocation21 [shape = 's32[]', space=sflag, size = 0x4, offset = 0, fixed_abs, tag = 'sflag constant byte address 0x0 - dummy sync flag']
  #allocation22 [shape = 's32[]', space=sflag, size = 0x4, offset = 0, fixed_abs, tag = 'sflag constant byte address 0x0 - dummy sync flag']
  #allocation23 [shape = 's32[]', space=sflag, size = 0x4, offset = 0, fixed_abs, tag = 'sflag constant byte address 0x0 - dummy sync flag']
  #allocation24 [shape = 's32[]', space=sflag, size = 0x4, offset = 0, fixed_abs, tag = 'sflag constant byte address 0x0 - dummy sync flag']
  #allocation25 [shape = 's32[]', space=sflag, size = 0x4, offset = 0, fixed_abs, tag = 'sflag constant byte address 0x0 - dummy sync flag']
  #allocation26 [shape = 's32[]', space=sflag, size = 0x4, offset = 0, fixed_abs, tag = 'sflag constant byte address 0x0 - dummy sync flag']
  #allocation27 [shape = 's32[]', space=sflag, size = 0x4, offset = 0, fixed_abs, tag = 'sflag constant byte address 0x0 - dummy sync flag']
  %s0 = inlined_call_operand.hbm [shape: s32[2,8], index: 0, kind: input, shape index: {}]
  %s1 = inlined_call_operand.hbm [shape: f32[100,128], index: 1, kind: input, shape index: {}]
  %s2 = inlined_call_operand.hbm [shape: bf16[128,128], index: 2, kind: input, shape index: {}]
  %s3 = inlined_call_operand.vmem [shape: f32[1,128], index: 3, kind: input, shape index: {}]
  %s4 = inlined_call_operand.hbm [shape: f32[2,8,128], index: 4, kind: output, shape index: {}]
  %s5 = sld [smem:[#allocation0]]
  $region77: #{tpu_custom_call.1} parent=0
    _
  %s7 = ssub.s32 1, %s5
  %s8 = scalar_select 0, %s7, %s5
  %10 = dma.hbm_to_smem %s0, 32, [#allocation5], [#allocation4]
  %11 = dma.done [#allocation4], 32
  %12 = sfence
  $region1: #{tpu_custom_call.1} parent=0
    #allocation6 [shape = 'u8[32768]{0}', space=vmem, size = 0x8000, scoped, tag = 'input window, operand 2, single buffered']
    #allocation7 [shape = 's32[2]{0}', space=sflag, size = 0x8, scoped, tag = 'scoped memory for tpu_custom_call.1']
    #allocation8 [shape = 's32[2]{0}', space=sflag, size = 0x8, scoped, tag = 'scoped memory for tpu_custom_call.1']
    #allocation9 [shape = 'u8[8192]{0}', space=vmem, size = 0x2000, scoped, tag = 'output window, operand 0']
    %13 = vsyncpa [#allocation7], 0
    %14 = vsyncpa [#allocation8], 0
    %s15 = scalar_lea.sflag [#allocation8], 1
    %16 = vsyncpa %s15, 0
    loop: start=0, step=1, limit=4
    $region2: #{tpu_custom_call.1} parent=1 // loop_pre_header
      _
    $region3: #{tpu_custom_call.1} parent=1 // loop_header
      %s18 = sphi 0, %s22
      %p19 = scmp.ge.s32.totalorder %s18, 4
      %s26 = sphi 0, %s26
      %s28 = sphi 0, %s26
      %s29 = sphi 0, %s28
      %s43 = sphi 0, %s29
      %s47 = sphi 0, %s47
      %s49 = sphi 0, %s47
      %s50 = sphi 0, %s49
      %s64 = sphi 0, %s50
      %s70 = sphi 0, %s72
      %s73 = sphi 0, %s70
      %s74 = sphi 0, %s73
      %s90 = sphi 0, %s74
    $region4: #{tpu_custom_call.1} parent=1 // loop_header_branch
      %21 = sbr.rel (%p19) target = $region8
    $region5: #{tpu_custom_call.1} parent=1 // loop_body
      %s23 = ssub.s32 %s18, 1
      %s24 = ssub.s32 %s18, 2
      %s25 = sadd.s32 %s18, 1
      %s27 = sadd.s32 %s26, 1
      %p30 = scmp.eq.s32.totalorder %s18, 1
      %p31 = scmp.ne.s32.totalorder %s26, %s28
      %p32 = scmp.eq.s32.totalorder %s18, 0
      %p33 = por %p31, %p32
      %p34 = scmp.ne.s32.totalorder %s26, %s28
      %p35 = scmp.eq.s32.totalorder %s23, 1
      %p36 = por %p34, %p35
      %p37 = scmp.ne.s32.totalorder %s28, %s29
      %p38 = scmp.eq.s32.totalorder %s23, 0
      %p39 = por %p37, %p38
      %p40 = scmp.ne.s32.totalorder %s28, %s29
      %p41 = scmp.eq.s32.totalorder %s24, 1
      %p42 = por %p40, %p41
      %p44 = scmp.ne.s32.totalorder %s29, %s43
      %p45 = scmp.eq.s32.totalorder %s24, 0
      %p46 = por %p44, %p45
      %s48 = sadd.s32 %s47, 1
      %p51 = scmp.eq.s32.totalorder %s18, 1
      %p52 = scmp.ne.s32.totalorder %s47, %s49
      %p53 = scmp.eq.s32.totalorder %s18, 0
      %p54 = por %p52, %p53
      %p55 = scmp.ne.s32.totalorder %s47, %s49
      %p56 = scmp.eq.s32.totalorder %s23, 1
      %p57 = por %p55, %p56
      %p58 = scmp.ne.s32.totalorder %s49, %s50
      %p59 = scmp.eq.s32.totalorder %s23, 0
      %p60 = por %p58, %p59
      %p61 = scmp.ne.s32.totalorder %s49, %s50
      %p62 = scmp.eq.s32.totalorder %s24, 1
      %p63 = por %p61, %p62
      %p65 = scmp.ne.s32.totalorder %s50, %s64
      %p66 = scmp.eq.s32.totalorder %s24, 0
      %p67 = por %p65, %p66
      %s68 = ssub.s32 %s18, %s25
      %p69 = scmp.eq.s32.totalorder %s68, 0
      %s71 = sadd.s32 %s70, 1
      %s72 = scalar_select %p69, %s70, %s71
      %p75 = pneg %p69
      %p76 = scmp.eq.s32.totalorder %s18, 1
      %p77 = por %p75, %p76
      %p78 = scmp.ne.s32.totalorder %s70, %s73
      %p79 = scmp.eq.s32.totalorder %s18, 0
      %p80 = por %p78, %p79
      %p81 = scmp.ne.s32.totalorder %s70, %s73
      %p82 = scmp.eq.s32.totalorder %s23, 1
      %p83 = por %p81, %p82
      %p84 = scmp.ne.s32.totalorder %s73, %s74
      %p85 = scmp.eq.s32.totalorder %s23, 0
      %p86 = por %p84, %p85
      %p87 = scmp.ne.s32.totalorder %s73, %s74
      %p88 = scmp.eq.s32.totalorder %s24, 1
      %p89 = por %p87, %p88
      %p91 = scmp.ne.s32.totalorder %s74, %s90
      %p92 = scmp.eq.s32.totalorder %s24, 0
      %p93 = por %p91, %p92
      %p94 = scmp.le.s32.totalorder 1, %s18
      %p95 = scmp.lt.s32.totalorder %s18, 3
      %p96 = pnand %p94, %p95
      %p97 = pneg %p96
      // Predicated region
      $region9: #{tpu_custom_call.1} parent=5 // pred_check
        _
      $region10: #{tpu_custom_call.1} parent=5 // pred_check_branch
        %99 = sbr.rel (%p96) target = $region12
      $region11: #{tpu_custom_call.1} parent=5 // pred_region
        %s100 = ssub.s32 %s18, 1
        // Predicated region
        $region13: #{tpu_custom_call.1} parent=11 // pred_check
          %p101 = pneg %p39
        $region14: #{tpu_custom_call.1} parent=11 // pred_check_branch
          %103 = sbr.rel (%p101) target = $region16
        $region15: #{tpu_custom_call.1} parent=11 // pred_region
          %s105 = ssub.s32 1024, 1024
          %106 = vsyncadd [#allocation7], %s105
          %s107 = sshll.u32 [#allocation6], 4
          %s108 = int_to_ptr.vmem [resolvable:$true] %s107
          %113 = dma.hbm_to_vmem [thread:$0]  %s2, 1024, %s108, [#allocation7], 64, 64, 4
        $region16: #{tpu_custom_call.1} parent=11 // pred_fallthru
          _
        // Predicated region
        $region17: #{tpu_custom_call.1} parent=11 // pred_check
          %p114 = pneg %p60
        $region18: #{tpu_custom_call.1} parent=11 // pred_check_branch
          %116 = sbr.rel (%p114) target = $region20
        $region19: #{tpu_custom_call.1} parent=11 // pred_region
          _
        $region20: #{tpu_custom_call.1} parent=11 // pred_fallthru
          _
      $region12: #{tpu_custom_call.1} parent=5 // pred_fallthru
        _
      %p117 = scmp.lt.s32.totalorder %s18, 2
      // Predicated region
      $region21: #{tpu_custom_call.1} parent=5 // pred_check
        %p118 = pneg %p117
      $region22: #{tpu_custom_call.1} parent=5 // pred_check_branch
        %120 = sbr.rel (%p118) target = $region24
      $region23: #{tpu_custom_call.1} parent=5 // pred_region
        _
      $region24: #{tpu_custom_call.1} parent=5 // pred_fallthru
        _
      %p121 = scmp.le.s32.totalorder 1, %s18
      %p122 = scmp.lt.s32.totalorder %s18, 3
      %p123 = pnand %p121, %p122
      %p124 = pneg %p123
      // Predicated region
      $region25: #{tpu_custom_call.1} parent=5 // pred_check
        _
      $region26: #{tpu_custom_call.1} parent=5 // pred_check_branch
        %126 = sbr.rel (%p123) target = $region28
      $region27: #{tpu_custom_call.1} parent=5 // pred_region
        %s127 = ssub.s32 %s18, 1
        // Predicated region
        $region29: #{tpu_custom_call.1} parent=27 // pred_check
          %p128 = pneg %p39
        $region30: #{tpu_custom_call.1} parent=27 // pred_check_branch
          %130 = sbr.rel (%p128) target = $region32
        $region31: #{tpu_custom_call.1} parent=27 // pred_region
          %131 = dma.done [#allocation7], 1024
        $region32: #{tpu_custom_call.1} parent=27 // pred_fallthru
          _
        %p132 = pneg %p39
        %p133 = pneg %p36
        %p134 = pneg %p60
        %p135 = pneg %p57
        %p136 = pneg %p86
        %p137 = pneg %p83
        %s138 = sand.u32 %s73, 1
        %s139 = scalar_lea.sflag [#allocation8], %s138
        %s140 = sand.u32 %s73, 1
        %s141 = smul.addr %s140, 8
        %s142 = scalar_lea.vmem [#allocation9], %s141
        %s144 = smul.u32 %s23, 128
        %s145 = sld [smem:[#allocation5 + %s144]]
        %p146 = scmp.gt.s32.totalorder %s145, 0
        %s147 = scalar_select %p146, %s145, 0
        %p148 = scmp.lt.s32.totalorder %s147, 99
        %s149 = scalar_select %p148, %s147, 99
        %s150 = smul.addr %s149, 16
        %s151 = scalar_lea.hbm %s1, %s150
        // Predicated region
        $region33: #{tpu_custom_call.1} parent=27 // pred_check
          _
        $region34: #{tpu_custom_call.1} parent=27 // pred_check_branch
          %153 = sbr.rel target = $region36
        $region35: #{tpu_custom_call.1} parent=27 // pred_region
          %154 = sst [smem:[#allocation12]] [#allocation11]
          %155 = sst [smem:[#allocation13]] [#allocation10]
        $region36: #{tpu_custom_call.1} parent=27 // pred_fallthru
          _
        %157 = shalt.err (0)
        %s159 = sshll.u32 [#allocation2], 4
        %s160 = int_to_ptr.vmem [resolvable:$true] %s159
        %162 = dma.hbm_to_vmem [thread:$0]  %s151, 16, %s160, [#allocation3]
        %s163 = sadd.s32 %s144, 1
        %s164 = sld [smem:[#allocation5 + %s163]]
        %p165 = scmp.gt.s32.totalorder %s164, 0
        %s166 = scalar_select %p165, %s164, 0
        %p167 = scmp.lt.s32.totalorder %s166, 99
        %s168 = scalar_select %p167, %s166, 99
        %s169 = smul.addr %s168, 16
        %s170 = scalar_lea.hbm %s1, %s169
        %s171 = scalar_lea.vmem [#allocation2], 1
        %s172 = scalar_lea.sflag [#allocation3], 1
        // Predicated region
        $region37: #{tpu_custom_call.1} parent=27 // pred_check
          _
        $region38: #{tpu_custom_call.1} parent=27 // pred_check_branch
          %174 = sbr.rel target = $region40
        $region39: #{tpu_custom_call.1} parent=27 // pred_region
          %175 = sst [smem:[#allocation12]] [#allocation15]
          %176 = sst [smem:[#allocation13]] [#allocation14]
        $region40: #{tpu_custom_call.1} parent=27 // pred_fallthru
          _
        %178 = shalt.err (0)
        %s180 = sshll.u32 %s171, 4
        %s181 = int_to_ptr.vmem [resolvable:$true] %s180
        %183 = dma.hbm_to_vmem [thread:$0]  %s170, 16, %s181, %s172
        %s184 = sadd.s32 %s144, 2
        %s185 = sld [smem:[#allocation5 + %s184]]
        %p186 = scmp.gt.s32.totalorder %s185, 0
        %s187 = scalar_select %p186, %s185, 0
        %p188 = scmp.lt.s32.totalorder %s187, 99
        %s189 = scalar_select %p188, %s187, 99
        %s190 = smul.addr %s189, 16
        %s191 = scalar_lea.hbm %s1, %s190
        %s192 = scalar_lea.vmem [#allocation2], 2
        %s193 = scalar_lea.sflag [#allocation3], 2
        // Predicated region
        $region41: #{tpu_custom_call.1} parent=27 // pred_check
          _
        $region42: #{tpu_custom_call.1} parent=27 // pred_check_branch
          %195 = sbr.rel target = $region44
        $region43: #{tpu_custom_call.1} parent=27 // pred_region
          %196 = sst [smem:[#allocation12]] [#allocation17]
          %197 = sst [smem:[#allocation13]] [#allocation16]
        $region44: #{tpu_custom_call.1} parent=27 // pred_fallthru
          _
        %199 = shalt.err (0)
        %s201 = sshll.u32 %s192, 4
        %s202 = int_to_ptr.vmem [resolvable:$true] %s201
        %204 = dma.hbm_to_vmem [thread:$0]  %s191, 16, %s202, %s193
        %s205 = sadd.s32 %s144, 3
        %s206 = sld [smem:[#allocation5 + %s205]]
        %p207 = scmp.gt.s32.totalorder %s206, 0
        %s208 = scalar_select %p207, %s206, 0
        %p209 = scmp.lt.s32.totalorder %s208, 99
        %s210 = scalar_select %p209, %s208, 99
        %s211 = smul.addr %s210, 16
        %s212 = scalar_lea.hbm %s1, %s211
        %s213 = scalar_lea.vmem [#allocation2], 3
        %s214 = scalar_lea.sflag [#allocation3], 3
        // Predicated region
        $region45: #{tpu_custom_call.1} parent=27 // pred_check
          _
        $region46: #{tpu_custom_call.1} parent=27 // pred_check_branch
          %216 = sbr.rel target = $region48
        $region47: #{tpu_custom_call.1} parent=27 // pred_region
          %217 = sst [smem:[#allocation12]] [#allocation19]
          %218 = sst [smem:[#allocation13]] [#allocation18]
        $region48: #{tpu_custom_call.1} parent=27 // pred_fallthru
          _
        %220 = shalt.err (0)
        %s222 = sshll.u32 %s213, 4
        %s223 = int_to_ptr.vmem [resolvable:$true] %s222
        %225 = dma.hbm_to_vmem [thread:$0]  %s212, 16, %s223, %s214
        %s226 = sadd.s32 %s144, 4
        %s227 = sld [smem:[#allocation5 + %s226]]
        %p228 = scmp.gt.s32.totalorder %s227, 0
        %s229 = scalar_select %p228, %s227, 0
        %p230 = scmp.lt.s32.totalorder %s229, 99
        %s231 = scalar_select %p230, %s229, 99
        %s232 = smul.addr %s231, 16
        %s233 = scalar_lea.hbm %s1, %s232
        %s234 = scalar_lea.vmem [#allocation2], 4
        %s235 = scalar_lea.sflag [#allocation3], 4
        // Predicated region
        $region49: #{tpu_custom_call.1} parent=27 // pred_check
          _
        $region50: #{tpu_custom_call.1} parent=27 // pred_check_branch
          %237 = sbr.rel target = $region52
        $region51: #{tpu_custom_call.1} parent=27 // pred_region
          %238 = sst [smem:[#allocation12]] [#allocation21]
          %239 = sst [smem:[#allocation13]] [#allocation20]
        $region52: #{tpu_custom_call.1} parent=27 // pred_fallthru
          _
        %241 = shalt.err (0)
        %s243 = sshll.u32 %s234, 4
        %s244 = int_to_ptr.vmem [resolvable:$true] %s243
        %246 = dma.hbm_to_vmem [thread:$0]  %s233, 16, %s244, %s235
        %s247 = sadd.s32 %s144, 5
        %s248 = sld [smem:[#allocation5 + %s247]]
        %p249 = scmp.gt.s32.totalorder %s248, 0
        %s250 = scalar_select %p249, %s248, 0
        %p251 = scmp.lt.s32.totalorder %s250, 99
        %s252 = scalar_select %p251, %s250, 99
        %s253 = smul.addr %s252, 16
        %s254 = scalar_lea.hbm %s1, %s253
        %s255 = scalar_lea.vmem [#allocation2], 5
        %s256 = scalar_lea.sflag [#allocation3], 5
        // Predicated region
        $region53: #{tpu_custom_call.1} parent=27 // pred_check
          _
        $region54: #{tpu_custom_call.1} parent=27 // pred_check_branch
          %258 = sbr.rel target = $region56
        $region55: #{tpu_custom_call.1} parent=27 // pred_region
          %259 = sst [smem:[#allocation12]] [#allocation23]
          %260 = sst [smem:[#allocation13]] [#allocation22]
        $region56: #{tpu_custom_call.1} parent=27 // pred_fallthru
          _
        %262 = shalt.err (0)
        %s264 = sshll.u32 %s255, 4
        %s265 = int_to_ptr.vmem [resolvable:$true] %s264
        %267 = dma.hbm_to_vmem [thread:$0]  %s254, 16, %s265, %s256
        %s268 = sadd.s32 %s144, 6
        %s269 = sld [smem:[#allocation5 + %s268]]
        %p270 = scmp.gt.s32.totalorder %s269, 0
        %s271 = scalar_select %p270, %s269, 0
        %p272 = scmp.lt.s32.totalorder %s271, 99
        %s273 = scalar_select %p272, %s271, 99
        %s274 = smul.addr %s273, 16
        %s275 = scalar_lea.hbm %s1, %s274
        %s276 = scalar_lea.vmem [#allocation2], 6
        %s277 = scalar_lea.sflag [#allocation3], 6
        // Predicated region
        $region57: #{tpu_custom_call.1} parent=27 // pred_check
          _
        $region58: #{tpu_custom_call.1} parent=27 // pred_check_branch
          %279 = sbr.rel target = $region60
        $region59: #{tpu_custom_call.1} parent=27 // pred_region
          %280 = sst [smem:[#allocation12]] [#allocation25]
          %281 = sst [smem:[#allocation13]] [#allocation24]
        $region60: #{tpu_custom_call.1} parent=27 // pred_fallthru
          _
        %283 = shalt.err (0)
        %s285 = sshll.u32 %s276, 4
        %s286 = int_to_ptr.vmem [resolvable:$true] %s285
        %288 = dma.hbm_to_vmem [thread:$0]  %s275, 16, %s286, %s277
        %s289 = sadd.s32 %s144, 7
        %s290 = sld [smem:[#allocation5 + %s289]]
        %p291 = scmp.gt.s32.totalorder %s290, 0
        %s292 = scalar_select %p291, %s290, 0
        %p293 = scmp.lt.s32.totalorder %s292, 99
        %s294 = scalar_select %p293, %s292, 99
        %s295 = smul.addr %s294, 16
        %s296 = scalar_lea.hbm %s1, %s295
        %s297 = scalar_lea.vmem [#allocation2], 7
        %s298 = scalar_lea.sflag [#allocation3], 7
        // Predicated region
        $region61: #{tpu_custom_call.1} parent=27 // pred_check
          _
        $region62: #{tpu_custom_call.1} parent=27 // pred_check_branch
          %300 = sbr.rel target = $region64
        $region63: #{tpu_custom_call.1} parent=27 // pred_region
          %301 = sst [smem:[#allocation12]] [#allocation27]
          %302 = sst [smem:[#allocation13]] [#allocation26]
        $region64: #{tpu_custom_call.1} parent=27 // pred_fallthru
          _
        %304 = shalt.err (0)
        %s306 = sshll.u32 %s297, 4
        %s307 = int_to_ptr.vmem [resolvable:$true] %s306
        %309 = dma.hbm_to_vmem [thread:$0]  %s296, 16, %s307, %s298
        %s310 = smul.u32 1, 1
        %s311 = sshll.u32 %s310, 4
        %312 = dma.done [#allocation3], %s311
        %s313 = sshll.u32 %s310, 4
        %314 = dma.done %s172, %s313
        %s315 = sshll.u32 %s310, 4
        %316 = dma.done %s193, %s315
        %s317 = sshll.u32 %s310, 4
        %318 = dma.done %s214, %s317
        %s319 = sshll.u32 %s310, 4
        %320 = dma.done %s235, %s319
        %s321 = sshll.u32 %s310, 4
        %322 = dma.done %s256, %s321
        %s323 = sshll.u32 %s310, 4
        %324 = dma.done %s277, %s323
        %s325 = sshll.u32 %s310, 4
        %326 = dma.done %s298, %s325
        %v327 = vld [vmem:[#allocation2] sm:$0xff]
        %v328 = vpack.c.bf16 %v327, %v327
        %v329 = vld [vmem:[#allocation6] sm:$0xf]
        %v330 = vld [vmem:[#allocation6 + $0x4] sm:$0xf]
        %v331 = vld [vmem:[#allocation6 + $0x8] sm:$0xf]
        %v332 = vld [vmem:[#allocation6 + $0xc] sm:$0xf]
        %v333 = vld [vmem:[#allocation6 + $0x10] sm:$0xf]
        %v334 = vld [vmem:[#allocation6 + $0x14] sm:$0xf]
        %v335 = vld [vmem:[#allocation6 + $0x18] sm:$0xf]
        %v336 = vld [vmem:[#allocation6 + $0x1c] sm:$0xf]
        %v337 = vld [vmem:[#allocation6 + $0x20] sm:$0xf]
        %v338 = vld [vmem:[#allocation6 + $0x24] sm:$0xf]
        %v339 = vld [vmem:[#allocation6 + $0x28] sm:$0xf]
        %v340 = vld [vmem:[#allocation6 + $0x2c] sm:$0xf]
        %v341 = vld [vmem:[#allocation6 + $0x30] sm:$0xf]
        %v342 = vld [vmem:[#allocation6 + $0x34] sm:$0xf]
        %v343 = vld [vmem:[#allocation6 + $0x38] sm:$0xf]
        %v344 = vld [vmem:[#allocation6 + $0x3c] sm:$0xf]
        %v345 = vld [vmem:[%s3] sm:$0x1]
        %v347 = vlaneseq
        %v348 = vshrl.u32 %v347, 7
        %v349 = vsub.s32 0, %v348
        %v350 = vrot.slane %v345, %v349
        %v368 = vunpack.c.l.b16 %v329
        %v369 = vunpack.c.l.b16 %v330
        %v370 = vunpack.c.l.b16 %v331
        %v371 = vunpack.c.l.b16 %v332
        %v372 = vunpack.c.l.b16 %v333
        %v373 = vunpack.c.l.b16 %v334
        %v374 = vunpack.c.l.b16 %v335
        %v375 = vunpack.c.l.b16 %v336
        %v376 = vunpack.c.l.b16 %v337
        %v377 = vunpack.c.l.b16 %v338
        %v378 = vunpack.c.l.b16 %v339
        %v379 = vunpack.c.l.b16 %v340
        %v380 = vunpack.c.l.b16 %v341
        %v381 = vunpack.c.l.b16 %v342
        %v382 = vunpack.c.l.b16 %v343
        %v383 = vunpack.c.l.b16 %v344
        %v384 = vpack.c.b16 %v369, %v368
        %v385 = vpack.c.b16 %v371, %v370
        %v386 = vpack.c.b16 %v373, %v372
        %v387 = vpack.c.b16 %v375, %v374
        %v388 = vpack.c.b16 %v377, %v376
        %v389 = vpack.c.b16 %v379, %v378
        %v390 = vpack.c.b16 %v381, %v380
        %v391 = vpack.c.b16 %v383, %v382
        %400 = vmatprep.subr.bf16.mxu0 0
        %401 = vmatpush1.bf16.msra.mxu0 %v391
        %402 = vmatprep.subr.bf16.mxu0 0
        %403 = vmatpush1.bf16.msra.mxu0 %v390
        %404 = vmatprep.subr.bf16.mxu0 0
        %405 = vmatpush1.bf16.msra.mxu0 %v389
        %406 = vmatprep.subr.bf16.mxu0 0
        %407 = vmatpush1.bf16.msra.mxu0 %v388
        %408 = vmatprep.subr.bf16.mxu0 0
        %409 = vmatpush1.bf16.msra.mxu0 %v387
        %410 = vmatprep.subr.bf16.mxu0 0
        %411 = vmatpush1.bf16.msra.mxu0 %v386
        %412 = vmatprep.subr.bf16.mxu0 0
        %413 = vmatpush1.bf16.msra.mxu0 %v385
        %414 = vmatprep.subr.bf16.mxu0 0
        %415 = vmatpush1.bf16.msra.mxu0 %v384
        %416 = vmatprep.subr.bf16.mxu0 0
        %417 = vmatpush2.bf16.msra.mxu0 0
        %418 = vmatprep.subr.bf16.mxu0 0
        %419 = vmatpush2.bf16.msra.mxu0 0
        %420 = vmatprep.subr.bf16.mxu0 0
        %421 = vmatpush2.bf16.msra.mxu0 0
        %422 = vmatprep.subr.bf16.mxu0 0
        %423 = vmatpush2.bf16.msra.mxu0 0
        %424 = vmatprep.subr.bf16.mxu0 0
        %425 = vmatpush2.bf16.msra.mxu0 0
        %426 = vmatprep.subr.bf16.mxu0 0
        %427 = vmatpush2.bf16.msra.mxu0 0
        %428 = vmatprep.subr.bf16.mxu0 0
        %429 = vmatpush2.bf16.msra.mxu0 0
        %430 = vmatprep.subr.bf16.mxu0 0
        %431 = vmatpush2.bf16.msra.mxu0 0
        %432 = vmatprep.mubr.bf16.mxu0 0
        %433 = vmatmul.mubr.bf16.gmra.mxu0 %v328
        %v434 = vpop.f32.mrf.mxu0
        %v435 = vadd.f32 %v350, %v434
        %v436 = vpop.f32.mrf.mxu0
        %v437 = vpop.f32.mrf.mxu0
        %v438 = vpop.f32.mrf.mxu0
        %439 = vdwg.mxu0
        %v440 = vtanh.pop %v435
        %441 = vst [vmem:[%s142] sm:$0xff] %v440
        %s442 = sand.u32 %s73, 1
        %s443 = scalar_lea.sflag [#allocation8], %s442
        %s444 = sand.u32 %s73, 1
        %s445 = smul.addr %s444, 8
        %s446 = scalar_lea.vmem [#allocation9], %s445
        // Predicated region
        $region65: #{tpu_custom_call.1} parent=27 // pred_check
          %p447 = pneg %p83
        $region66: #{tpu_custom_call.1} parent=27 // pred_check_branch
          %449 = sbr.rel (%p447) target = $region68
        $region67: #{tpu_custom_call.1} parent=27 // pred_region
          %s451 = ssub.s32 128, 128
          %452 = vsyncadd %s443, %s451
          %s453 = smul.addr %s23, 128
          %s454 = scalar_lea.hbm %s4, %s453
          %s456 = sshll.u32 %s446, 4
          %s457 = int_to_ptr.vmem [resolvable:$true] %s456
          %459 = dma.vmem_to_hbm [thread:$0]  %s457, 128, %s454, %s443
        $region68: #{tpu_custom_call.1} parent=27 // pred_fallthru
          _
      $region28: #{tpu_custom_call.1} parent=5 // pred_fallthru
        _
      %p460 = scmp.le.s32.totalorder 2, %s18
      // Predicated region
      $region69: #{tpu_custom_call.1} parent=5 // pred_check
        %p461 = pneg %p460
      $region70: #{tpu_custom_call.1} parent=5 // pred_check_branch
        %463 = sbr.rel (%p461) target = $region72
      $region71: #{tpu_custom_call.1} parent=5 // pred_region
        %s464 = ssub.s32 %s18, 2
        // Predicated region
        $region73: #{tpu_custom_call.1} parent=71 // pred_check
          %p465 = pneg %p89
        $region74: #{tpu_custom_call.1} parent=71 // pred_check_branch
          %467 = sbr.rel (%p465) target = $region76
        $region75: #{tpu_custom_call.1} parent=71 // pred_region
          %s468 = sand.u32 %s74, 1
          %s469 = scalar_lea.sflag [#allocation8], %s468
          %s470 = sand.u32 %s74, 1
          %s471 = smul.addr %s470, 8
          %s472 = scalar_lea.vmem [#allocation9], %s471
          %473 = dma.done %s469, 128
        $region76: #{tpu_custom_call.1} parent=71 // pred_fallthru
          _
      $region72: #{tpu_custom_call.1} parent=5 // pred_fallthru
        _
    $region6: #{tpu_custom_call.1} parent=1 // loop_footer
      %s22 = sadd.s32 1, %s18
    $region7: #{tpu_custom_call.1} parent=1 // loop_footer_branch
      %17 = sbr.rel target = $region3
    $region8: #{tpu_custom_call.1} parent=1 // loop_exit
      _
    %474 = vsyncpa [#allocation7], 1
    %s475 = scalar_lea.sflag [#allocation7], 1
    %476 = vsyncpa %s475, 1
    %477 = vsyncpa [#allocation8], 1
    %s478 = scalar_lea.sflag [#allocation8], 1
    %479 = vsyncpa %s478, 1
  %480 = vsyncmov [#allocation3]
  %s481 = vpop.sfrf %480
  %p482 = scmp.eq.s32.totalorder %s481, 0
  %p483 = pneg %p482
  %485 = shalt.err (%p483)
  %s486 = scalar_lea.sflag [#allocation3], 1
  %487 = vsyncmov %s486
  %s488 = vpop.sfrf %487
  %p489 = scmp.eq.s32.totalorder %s488, 0
  %p490 = pneg %p489
  %492 = shalt.err (%p490)
  %s493 = scalar_lea.sflag [#allocation3], 2
  %494 = vsyncmov %s493
  %s495 = vpop.sfrf %494
  %p496 = scmp.eq.s32.totalorder %s495, 0
  %p497 = pneg %p496
  %499 = shalt.err (%p497)
  %s500 = scalar_lea.sflag [#allocation3], 3
  %501 = vsyncmov %s500
  %s502 = vpop.sfrf %501
  %p503 = scmp.eq.s32.totalorder %s502, 0
  %p504 = pneg %p503
  %506 = shalt.err (%p504)
  %s507 = scalar_lea.sflag [#allocation3], 4
  %508 = vsyncmov %s507
  %s509 = vpop.sfrf %508
  %p510 = scmp.eq.s32.totalorder %s509, 0
  %p511 = pneg %p510
  %513 = shalt.err (%p511)
  %s514 = scalar_lea.sflag [#allocation3], 5
  %515 = vsyncmov %s514
  %s516 = vpop.sfrf %515
  %p517 = scmp.eq.s32.totalorder %s516, 0
  %p518 = pneg %p517
  %520 = shalt.err (%p518)
  %s521 = scalar_lea.sflag [#allocation3], 6
  %522 = vsyncmov %s521
  %s523 = vpop.sfrf %522
  %p524 = scmp.eq.s32.totalorder %s523, 0
  %p525 = pneg %p524
  %527 = shalt.err (%p525)
  %s528 = scalar_lea.sflag [#allocation3], 7
  %529 = vsyncmov %s528
  %s530 = vpop.sfrf %529
  %p531 = scmp.eq.s32.totalorder %s530, 0
  %p532 = pneg %p531
  %534 = shalt.err (%p532)

</llo_original>
